<compile_context>
chip_gen: v7x
topology: tpu7x:2x2x1
jax: 0.10.0
libtpu: 0.0.40
codegen_flags: <defaults>
</compile_context>

<pallas_src>
import jax
import jax.numpy as jnp
from jax.experimental import pallas as pl
from jax.experimental.pallas import tpu as pltpu


_LANES = 128
_SUBLANES = 8


def _round_up(x, m):
    return ((x + m - 1) // m) * m


def _full_block_spec(shape):
    return pl.BlockSpec(shape, lambda i: (0,) * len(shape))


def _make_yolo3_kernel(segments):
    """segments: static tuple of (col_start, col_width), all multiples of 128."""

    def kernel(x_ref, w_ref, s_ref, o_ref):
        # x_ref : (C_in_max, total_cols)    packed input slab
        # w_ref : (3, C_out_max, C_in_max)  folded conv weights (BN scale in)
        # s_ref : (3, C_out_max, 1)         folded per-channel shifts
        # o_ref : (C_out_max, total_cols)   packed output slab
        for i, (start, width) in enumerate(segments):   # static 3-way unroll
            w = w_ref[i]                       # (C_out_max, C_in_max), loaded once
            s = s_ref[i]                       # (C_out_max, 1), loaded once
            x = x_ref[:, start:start + width]  # lane-aligned static slice
            acc = jnp.dot(w, x, preferred_element_type=jnp.float32)
            # lane-dense store: start and width are multiples of 128
            o_ref[:, start:start + width] = (acc + s).astype(o_ref.dtype)

    return kernel


def fold_and_pack_params(raw_params, eps=1e-5):
    """One-time parameter preprocessing (NOT in the per-call path).

    For each branch (1x1 conv weight W is (C_in, C_out)):
        y     = W^T x + b
        BN(y) = (y - mean) * gamma / sqrt(var + eps) + beta
              = (scale * W)^T x + ((b - mean) * scale + beta)

    All branches are zero-padded to a common (C_out_max, C_in_max) and stacked
    so the kernel sees exactly one weight slab and one shift slab.
    """
    folded = []
    for p in raw_params:
        scale = p["gamma"] / jnp.sqrt(p["var"] + eps)             # (C_out,)
        w_f = jnp.transpose(p["w"] * scale[None, :])              # (C_out, C_in)
        shift = (p["b"] - p["mean"]) * scale + p["beta"]          # (C_out,)
        folded.append((w_f.astype(jnp.float32), shift.astype(jnp.float32)))

    c_ins = tuple(int(w.shape[1]) for w, _ in folded)
    c_outs = tuple(int(w.shape[0]) for w, _ in folded)
    c_in_max = _round_up(max(c_ins), _SUBLANES)
    c_out_max = _round_up(max(c_outs), _SUBLANES)

    w_packed = jnp.zeros((len(folded), c_out_max, c_in_max), jnp.float32)
    s_packed = jnp.zeros((len(folded), c_out_max, 1), jnp.float32)
    for i, (w_f, shift) in enumerate(folded):
        w_packed = w_packed.at[i, :c_outs[i], :c_ins[i]].set(w_f)
        s_packed = s_packed.at[i, :c_outs[i], 0].set(shift)

    return dict(w_packed=w_packed, s_packed=s_packed,
                c_outs=c_outs, c_ins=c_ins)


def yolo_3branch(x1, x2, x3, packed):
    """Fused forward of the three Conv2D_BN heads. Inputs/outputs are NCHW."""
    xs = (x1, x2, x3)
    w_packed = packed["w_packed"]          # (3, C_out_max, C_in_max)
    s_packed = packed["s_packed"]          # (3, C_out_max, 1)
    c_outs = packed["c_outs"]
    c_in_max = w_packed.shape[2]
    c_out_max = w_packed.shape[1]

    # ---- pack inputs into one lane-aligned (C_in_max, total_cols) slab -----
    cols = [x.shape[0] * x.shape[2] * x.shape[3] for x in xs]      # N*H*W
    widths = [_round_up(c, _LANES) for c in cols]
    starts = [sum(widths[:i]) for i in range(len(widths))]
    total_cols = sum(widths)

    slabs = []
    for x, c, width in zip(xs, cols, widths):
        n, c_in, h, w = x.shape
        # NCHW -> (C_in, N*H*W): this layout change is the price for collapsing
        # the batch into one matmul per branch and lane-dense output stores.
        xt = jnp.transpose(x, (1, 0, 2, 3)).reshape(c_in, c)
        xt = jnp.pad(xt, ((0, c_in_max - c_in), (0, width - c)))
        slabs.append(xt)
    x_slab = jnp.concatenate(slabs, axis=1).astype(jnp.float32)

    segments = tuple(zip(starts, widths))
    kernel = _make_yolo3_kernel(segments)

    out_shape = jax.ShapeDtypeStruct((c_out_max, total_cols), jnp.float32)

    flops = sum(2 * c_out_max * c_in_max * w for w in widths)
    bytes_accessed = sum(int(a.size) * a.dtype.itemsize
                         for a in (x_slab, w_packed, s_packed))
    bytes_accessed += c_out_max * total_cols * 4

    o_slab = pl.pallas_call(
        kernel,
        out_shape=out_shape,
        grid_spec=pl.GridSpec(
            grid=(1,),
            in_specs=[_full_block_spec(x_slab.shape),
                      _full_block_spec(w_packed.shape),
                      _full_block_spec(s_packed.shape)],
            out_specs=_full_block_spec(out_shape.shape),
        ),
        compiler_params=pltpu.CompilerParams(
            dimension_semantics=("arbitrary",)),
        cost_estimate=pl.CostEstimate(
            flops=flops, transcendentals=0, bytes_accessed=bytes_accessed),
    )(x_slab, w_packed, s_packed)

    # ---- unpack the output slab back to per-branch NCHW --------------------
    outs = []
    for x, c_out, start, c in zip(xs, c_outs, starts, cols):
        n, _, h, w = x.shape
        o = o_slab[:c_out, start:start + c]                       # (C_out, N*H*W)
        o = jnp.transpose(o.reshape(c_out, n, h, w), (1, 0, 2, 3))  # NCHW
        outs.append(o)
    return outs


def make_branch_params(key, c_in, c_out):
    k = jax.random.split(key, 6)
    w = jax.random.normal(k[0], (c_in, c_out), jnp.float32) * 0.1   # 1x1 conv weight
    b = jax.random.normal(k[1], (c_out,), jnp.float32) * 0.1        # conv bias
    gamma = 1.0 + 0.1 * jax.random.normal(k[2], (c_out,), jnp.float32)
    beta = 0.1 * jax.random.normal(k[3], (c_out,), jnp.float32)
    running_mean = 0.1 * jax.random.normal(k[4], (c_out,), jnp.float32)
    running_var = 0.5 + jax.random.uniform(k[5], (c_out,), jnp.float32)
    return dict(w=w, b=b, gamma=gamma, beta=beta,
                mean=running_mean, var=running_var)


def _reference(x_nchw, p, eps=1e-5):
    # plain-JAX reference (unfused, NHWC path) for sanity checking
    N, C_in, H, W = x_nchw.shape
    x = jnp.transpose(x_nchw, (0, 2, 3, 1)).reshape(-1, C_in)
    y = x @ p["w"] + p["b"]
    y = (y - p["mean"]) / jnp.sqrt(p["var"] + eps) * p["gamma"] + p["beta"]
    C_out = p["w"].shape[1]
    return jnp.transpose(y.reshape(N, H, W, C_out), (0, 3, 1, 2))


if __name__ == "__main__":
    key = jax.random.PRNGKey(0)
    k_in, k_p1, k_p2, k_p3 = jax.random.split(key, 4)

    in_branch_channels = [8, 16, 32]
    out_branch_channels = [24, 24, 24]
    N = 2
    spatial = [16, 8, 4]  # big / middle / small feature maps

    kx = jax.random.split(k_in, 3)
    x1 = jax.random.normal(
        kx[0], (N, in_branch_channels[0], spatial[0], spatial[0]), jnp.float32)
    x2 = jax.random.normal(
        kx[1], (N, in_branch_channels[1], spatial[1], spatial[1]), jnp.float32)
    x3 = jax.random.normal(
        kx[2], (N, in_branch_channels[2], spatial[2], spatial[2]), jnp.float32)

    raw_params = [
        make_branch_params(k_p1, in_branch_channels[0], out_branch_channels[0]),
        make_branch_params(k_p2, in_branch_channels[1], out_branch_channels[1]),
        make_branch_params(k_p3, in_branch_channels[2], out_branch_channels[2]),
    ]

    # Parameter-time folding + packing (done once, outside the per-call path).
    packed = fold_and_pack_params(raw_params)

    big_out, middle_out, small_out = yolo_3branch(x1, x2, x3, packed)
    jax.block_until_ready((big_out, middle_out, small_out))

    # correctness sanity check against plain-JAX reference
    for out, x, p in zip((big_out, middle_out, small_out),
                         (x1, x2, x3), raw_params):
        ref = _reference(x, p)
        assert out.shape == ref.shape
        assert jnp.allclose(out, ref, atol=1e-4, rtol=1e-4)

    print("KERNEL_OK")
</pallas_src>

<mosaic_0001>
module attributes {stable_mosaic.version = 11 : i64} {
  func.func @kernel(%arg0: i32, %arg1: memref<32x768xf32, #tpu.memory_space<vmem>>, %arg2: memref<3x24x32xf32, #tpu.memory_space<vmem>>, %arg3: memref<3x24x1xf32, #tpu.memory_space<vmem>>, %arg4: memref<24x768xf32, #tpu.memory_space<vmem>>) attributes {dimension_semantics = [#tpu.dimension_semantics<arbitrary>], iteration_bounds = array<i64: 1>, scalar_prefetch = 0 : i64, scratch_operands = 0 : i64, tpu.core_type = #tpu.core_type<tc>, window_params = [{pipeline_mode = #tpu.pipeline_mode<synchronous>, transform_indices = @transform_0, window_bounds = array<i64: 32, 768>}, {pipeline_mode = #tpu.pipeline_mode<synchronous>, transform_indices = @transform_1, window_bounds = array<i64: 3, 24, 32>}, {pipeline_mode = #tpu.pipeline_mode<synchronous>, transform_indices = @transform_2, window_bounds = array<i64: 3, 24, 1>}, {pipeline_mode = #tpu.pipeline_mode<synchronous>, transform_indices = @transform_3, window_bounds = array<i64: 24, 768>}]} {
    %c0 = arith.constant 0 : index
    %c0_0 = arith.constant 0 : index
    %c0_1 = arith.constant 0 : index
    %0 = vector.load %arg2[%c0, %c0_0, %c0_1] : memref<3x24x32xf32, #tpu.memory_space<vmem>>, vector<1x24x32xf32>
    %1 = vector.shape_cast %0 : vector<1x24x32xf32> to vector<24x32xf32>
    %c0_2 = arith.constant 0 : index
    %c0_3 = arith.constant 0 : index
    %c0_4 = arith.constant 0 : index
    %2 = vector.load %arg3[%c0_2, %c0_3, %c0_4] : memref<3x24x1xf32, #tpu.memory_space<vmem>>, vector<1x24x1xf32>
    %3 = vector.shape_cast %2 : vector<1x24x1xf32> to vector<24x1xf32>
    %c0_5 = arith.constant 0 : index
    %c0_6 = arith.constant 0 : index
    %4 = vector.load %arg1[%c0_5, %c0_6] : memref<32x768xf32, #tpu.memory_space<vmem>>, vector<32x512xf32>
    %cst = arith.constant dense<0.000000e+00> : vector<24x512xf32>
    %5 = tpu.matmul %1, %4, %cst {dimension_numbers = #tpu.dot_dimension_numbers<[1], [0], [0], [1], [0, 0, 1, 1], [], []>} : vector<24x32xf32>, vector<32x512xf32>, vector<24x512xf32> -> vector<24x512xf32>
    %6 = vector.broadcast %3 : vector<24x1xf32> to vector<24x512xf32>
    %7 = arith.addf %5, %6 : vector<24x512xf32>
    %c0_7 = arith.constant 0 : index
    %c0_8 = arith.constant 0 : index
    %8 = vector.load %arg4[%c0_7, %c0_8] : memref<24x768xf32, #tpu.memory_space<vmem>>, vector<24x512xf32>
    tpu.vector_store %arg4[%c0_7, %c0_8], %7 {strides = array<i32>} : memref<24x768xf32, #tpu.memory_space<vmem>>, vector<24x512xf32>,
    %c1 = arith.constant 1 : index
    %c0_9 = arith.constant 0 : index
    %c0_10 = arith.constant 0 : index
    %9 = vector.load %arg2[%c1, %c0_9, %c0_10] : memref<3x24x32xf32, #tpu.memory_space<vmem>>, vector<1x24x32xf32>
    %10 = vector.shape_cast %9 : vector<1x24x32xf32> to vector<24x32xf32>
    %c1_11 = arith.constant 1 : index
    %c0_12 = arith.constant 0 : index
    %c0_13 = arith.constant 0 : index
    %11 = vector.load %arg3[%c1_11, %c0_12, %c0_13] : memref<3x24x1xf32, #tpu.memory_space<vmem>>, vector<1x24x1xf32>
    %12 = vector.shape_cast %11 : vector<1x24x1xf32> to vector<24x1xf32>
    %c0_14 = arith.constant 0 : index
    %c512 = arith.constant 512 : index
    %13 = vector.load %arg1[%c0_14, %c512] : memref<32x768xf32, #tpu.memory_space<vmem>>, vector<32x128xf32>
    %cst_15 = arith.constant dense<0.000000e+00> : vector<24x128xf32>
    %14 = tpu.matmul %10, %13, %cst_15 {dimension_numbers = #tpu.dot_dimension_numbers<[1], [0], [0], [1], [0, 0, 1, 1], [], []>} : vector<24x32xf32>, vector<32x128xf32>, vector<24x128xf32> -> vector<24x128xf32>
    %15 = vector.broadcast %12 : vector<24x1xf32> to vector<24x128xf32>
    %16 = arith.addf %14, %15 : vector<24x128xf32>
    %c0_16 = arith.constant 0 : index
    %c512_17 = arith.constant 512 : index
    %17 = vector.load %arg4[%c0_16, %c512_17] : memref<24x768xf32, #tpu.memory_space<vmem>>, vector<24x128xf32>
    tpu.vector_store %arg4[%c0_16, %c512_17], %16 {strides = array<i32>} : memref<24x768xf32, #tpu.memory_space<vmem>>, vector<24x128xf32>,
    %c2 = arith.constant 2 : index
    %c0_18 = arith.constant 0 : index
    %c0_19 = arith.constant 0 : index
    %18 = vector.load %arg2[%c2, %c0_18, %c0_19] : memref<3x24x32xf32, #tpu.memory_space<vmem>>, vector<1x24x32xf32>
    %19 = vector.shape_cast %18 : vector<1x24x32xf32> to vector<24x32xf32>
    %c2_20 = arith.constant 2 : index
    %c0_21 = arith.constant 0 : index
    %c0_22 = arith.constant 0 : index
    %20 = vector.load %arg3[%c2_20, %c0_21, %c0_22] : memref<3x24x1xf32, #tpu.memory_space<vmem>>, vector<1x24x1xf32>
    %21 = vector.shape_cast %20 : vector<1x24x1xf32> to vector<24x1xf32>
    %c0_23 = arith.constant 0 : index
    %c640 = arith.constant 640 : index
    %22 = vector.load %arg1[%c0_23, %c640] : memref<32x768xf32, #tpu.memory_space<vmem>>, vector<32x128xf32>
    %cst_24 = arith.constant dense<0.000000e+00> : vector<24x128xf32>
    %23 = tpu.matmul %19, %22, %cst_24 {dimension_numbers = #tpu.dot_dimension_numbers<[1], [0], [0], [1], [0, 0, 1, 1], [], []>} : vector<24x32xf32>, vector<32x128xf32>, vector<24x128xf32> -> vector<24x128xf32>
    %24 = vector.broadcast %21 : vector<24x1xf32> to vector<24x128xf32>
    %25 = arith.addf %23, %24 : vector<24x128xf32>
    %c0_25 = arith.constant 0 : index
    %c640_26 = arith.constant 640 : index
    %26 = vector.load %arg4[%c0_25, %c640_26] : memref<24x768xf32, #tpu.memory_space<vmem>>, vector<24x128xf32>
    tpu.vector_store %arg4[%c0_25, %c640_26], %25 {strides = array<i32>} : memref<24x768xf32, #tpu.memory_space<vmem>>, vector<24x128xf32>,
    return
  }
  func.func @transform_0(%arg0: i32) -> (i32, i32) {
    %c0_i32 = arith.constant 0 : i32
    %c0_i32_0 = arith.constant 0 : i32
    %c0_i32_1 = arith.constant 0 : i32
    return %c0_i32, %c0_i32_0 : i32, i32
  }
  func.func @transform_1(%arg0: i32) -> (i32, i32, i32) {
    %c0_i32 = arith.constant 0 : i32
    %c0_i32_0 = arith.constant 0 : i32
    %c0_i32_1 = arith.constant 0 : i32
    %c0_i32_2 = arith.constant 0 : i32
    return %c0_i32, %c0_i32_0, %c0_i32_1 : i32, i32, i32
  }
  func.func @transform_2(%arg0: i32) -> (i32, i32, i32) {
    %c0_i32 = arith.constant 0 : i32
    %c0_i32_0 = arith.constant 0 : i32
    %c0_i32_1 = arith.constant 0 : i32
    %c0_i32_2 = arith.constant 0 : i32
    return %c0_i32, %c0_i32_0, %c0_i32_1 : i32, i32, i32
  }
  func.func @transform_3(%arg0: i32) -> (i32, i32) {
    %c0_i32 = arith.constant 0 : i32
    %c0_i32_0 = arith.constant 0 : i32
    %c0_i32_1 = arith.constant 0 : i32
    return %c0_i32, %c0_i32_0 : i32, i32
  }
}

</mosaic_0001>

<llo_original>
// kernel: tpu_custom_call.1
$region0: #{tpu_custom_call.1}
  #allocation0 [shape = 'u32[]', space=smem, size = 0x4, offset = 0x4, fixed_abs, tag = 'smem constant byte address 0x4 - core index']
  #allocation1 [shape = 'u32[144,128]{1,0:T(1,128)}', space=vmem, size = 0x12000, scoped, tag = 'internal scratch']
  %s0 = inlined_call_operand.hbm [shape: f32[32,768], index: 0, kind: input, shape index: {}]
  %s1 = inlined_call_operand.vmem [shape: f32[3,24,32], index: 1, kind: input, shape index: {}]
  %s2 = inlined_call_operand.vmem [shape: f32[3,24,1], index: 2, kind: input, shape index: {}]
  %s3 = inlined_call_operand.hbm [shape: f32[24,768], index: 3, kind: output, shape index: {}]
  %s4 = sld [smem:[#allocation0]]
  $region26: #{tpu_custom_call.1} parent=0
    _
  %s6 = ssub.s32 1, %s4
  %s7 = scalar_select 0, %s6, %s4
  $region1: #{tpu_custom_call.1} parent=0
    #allocation2 [shape = 'u8[98304]{0}', space=vmem, size = 0x18000, scoped, tag = 'input window, operand 0, single buffered']
    #allocation3 [shape = 's32[1]{0}', space=sflag, size = 0x4, scoped, tag = 'scoped memory for tpu_custom_call.1']
    #allocation4 [shape = 's32[1]{0}', space=sflag, size = 0x4, scoped, tag = 'scoped memory for tpu_custom_call.1']
    #allocation5 [shape = 'u8[73728]{0}', space=vmem, size = 0x12000, scoped, tag = 'output window, operand 0, single buffered']
    %8 = vsyncpa [#allocation3], 0
    %9 = vsyncpa [#allocation4], 0
    // Predicated region
    $region2: #{tpu_custom_call.1} parent=1 // pred_check
      _
    $region3: #{tpu_custom_call.1} parent=1 // pred_check_branch
      %11 = sbr.rel (0) target = $region5
    $region4: #{tpu_custom_call.1} parent=1 // pred_region
      %s13 = ssub.s32 3072, 3072
      %14 = vsyncadd [#allocation3], %s13
      %s15 = sshll.u32 [#allocation2], 4
      %s16 = int_to_ptr.vmem [resolvable:$true] %s15
      %21 = dma.hbm_to_vmem [thread:$0]  %s0, 3072, %s16, [#allocation3], 768, 768, 48
    $region5: #{tpu_custom_call.1} parent=1 // pred_fallthru
      _
    // Predicated region
    $region6: #{tpu_custom_call.1} parent=1 // pred_check
      _
    $region7: #{tpu_custom_call.1} parent=1 // pred_check_branch
      %23 = sbr.rel (0) target = $region9
    $region8: #{tpu_custom_call.1} parent=1 // pred_region
      _
    $region9: #{tpu_custom_call.1} parent=1 // pred_fallthru
      _
    // Predicated region
    $region10: #{tpu_custom_call.1} parent=1 // pred_check
      _
    $region11: #{tpu_custom_call.1} parent=1 // pred_check_branch
      %25 = sbr.rel (0) target = $region13
    $region12: #{tpu_custom_call.1} parent=1 // pred_region
      _
    $region13: #{tpu_custom_call.1} parent=1 // pred_fallthru
      _
    // Predicated region
    $region14: #{tpu_custom_call.1} parent=1 // pred_check
      _
    $region15: #{tpu_custom_call.1} parent=1 // pred_check_branch
      %27 = sbr.rel (0) target = $region17
    $region16: #{tpu_custom_call.1} parent=1 // pred_region
      %28 = dma.done [#allocation3], 3072
    $region17: #{tpu_custom_call.1} parent=1 // pred_fallthru
      _
    %v29 = vld [vmem:[%s1] sm:$0xff]
    %v30 = vld [vmem:[%s1 + $0x8] sm:$0xff]
    %v31 = vld [vmem:[%s1 + $0x10] sm:$0xff]
    %v32 = vld [vmem:[%s2] sm:$0xff]
    %v33 = vld [vmem:[%s2 + $0x8] sm:$0xff]
    %v34 = vld [vmem:[%s2 + $0x10] sm:$0xff]
    %v35 = vld [vmem:[#allocation2] sm:$0xff]
    %v36 = vld [vmem:[#allocation2 + $0x8] sm:$0xff]
    %v37 = vld [vmem:[#allocation2 + $0x10] sm:$0xff]
    %v38 = vld [vmem:[#allocation2 + $0x18] sm:$0xff]
    %v39 = vld [vmem:[#allocation2 + $0x30] sm:$0xff]
    %v40 = vld [vmem:[#allocation2 + $0x38] sm:$0xff]
    %v41 = vld [vmem:[#allocation2 + $0x40] sm:$0xff]
    %v42 = vld [vmem:[#allocation2 + $0x48] sm:$0xff]
    %v43 = vld [vmem:[#allocation2 + $0x60] sm:$0xff]
    %v44 = vld [vmem:[#allocation2 + $0x68] sm:$0xff]
    %v45 = vld [vmem:[#allocation2 + $0x70] sm:$0xff]
    %v46 = vld [vmem:[#allocation2 + $0x78] sm:$0xff]
    %v47 = vld [vmem:[#allocation2 + $0x90] sm:$0xff]
    %v48 = vld [vmem:[#allocation2 + $0x98] sm:$0xff]
    %v49 = vld [vmem:[#allocation2 + $0xa0] sm:$0xff]
    %v50 = vld [vmem:[#allocation2 + $0xa8] sm:$0xff]
    %52 = vset.pattern.permute.xlu0 0
    %53 = vperm.xlu0 %52, %v32
    %v54 = vpop.permute.xlu0 %53
    %57 = vset.pattern.permute.xlu0 0
    %58 = vperm.xlu0 %57, %v33
    %v59 = vpop.permute.xlu0 %58
    %62 = vset.pattern.permute.xlu0 0
    %63 = vperm.xlu0 %62, %v34
    %v64 = vpop.permute.xlu0 %63
    %vm66 = vcmask 261120
    %v68 = vsel %vm66, %v29, 0
    %v71 = vsel %vm66, %v30, 0
    %v74 = vsel %vm66, %v31, 0
    %76 = vmatprep.subr.mxu0 %v36
    %77 = vmatpush1.msra.mxu0 %v35
    %78 = vmatprep.subr.mxu0 %v40
    %79 = vmatpush1.msra.mxu0 %v39
    %80 = vmatprep.subr.mxu0 %v44
    %81 = vmatpush1.msra.mxu0 %v43
    %82 = vmatprep.subr.mxu0 %v48
    %83 = vmatpush1.msra.mxu0 %v47
    %84 = vmatprep.subr.mxu0 0.0
    %85 = vmatpush1.msra.mxu0 0.0
    %86 = vmatprep.subr.mxu0 0.0
    %87 = vmatpush1.msra.mxu0 0.0
    %88 = vmatprep.subr.mxu0 0.0
    %89 = vmatpush1.msra.mxu0 0.0
    %90 = vmatprep.subr.mxu0 0.0
    %91 = vmatpush1.msra.mxu0 0.0
    %92 = vmatprep.subr.mxu0 0.0
    %93 = vmatpush1.msra.mxu0 0.0
    %94 = vmatprep.subr.mxu0 0.0
    %95 = vmatpush1.msra.mxu0 0.0
    %96 = vmatprep.subr.mxu0 0.0
    %97 = vmatpush1.msra.mxu0 0.0
    %98 = vmatprep.subr.mxu0 0.0
    %99 = vmatpush1.msra.mxu0 0.0
    %100 = vmatprep.subr.mxu0 0.0
    %101 = vmatpush1.msra.mxu0 0.0
    %102 = vmatprep.subr.mxu0 0.0
    %103 = vmatpush1.msra.mxu0 0.0
    %104 = vmatprep.subr.mxu0 0.0
    %105 = vmatpush1.msra.mxu0 0.0
    %106 = vmatprep.subr.mxu0 0.0
    %107 = vmatpush1.msra.mxu0 0.0
    %108 = vmatprep.subr.mxu0 0.0
    %109 = vmatpush1.msra.mxu0 0.0
    %110 = vmatprep.subr.mxu0 0.0
    %111 = vmatpush1.msra.mxu0 0.0
    %112 = vmatprep.subr.mxu0 0.0
    %113 = vmatpush1.msra.mxu0 0.0
    %114 = vmatprep.subr.mxu0 0.0
    %115 = vmatpush1.msra.mxu0 0.0
    %116 = vmatprep.subr.mxu0 0.0
    %117 = vmatpush1.msra.mxu0 0.0
    %118 = vmatprep.subr.mxu0 0.0
    %119 = vmatpush1.msra.mxu0 0.0
    %120 = vmatprep.subr.mxu0 0.0
    %121 = vmatpush1.msra.mxu0 0.0
    %122 = vmatprep.subr.mxu0 0.0
    %123 = vmatpush1.msra.mxu0 0.0
    %124 = vmatprep.subr.mxu0 0.0
    %125 = vmatpush1.msra.mxu0 0.0
    %126 = vmatprep.subr.mxu0 0.0
    %127 = vmatpush1.msra.mxu0 0.0
    %128 = vmatprep.subr.mxu0 0.0
    %129 = vmatpush1.msra.mxu0 0.0
    %130 = vmatprep.subr.mxu0 0.0
    %131 = vmatpush1.msra.mxu0 0.0
    %132 = vmatprep.subr.mxu0 0.0
    %133 = vmatpush1.msra.mxu0 0.0
    %134 = vmatprep.subr.mxu0 0.0
    %135 = vmatpush1.msra.mxu0 0.0
    %136 = vmatprep.subr.mxu0 0.0
    %137 = vmatpush1.msra.mxu0 0.0
    %138 = vmatprep.subr.mxu0 0.0
    %139 = vmatpush1.msra.mxu0 0.0
    %140 = vmatprep.mubr.f32.mxu0 0.0
    %141 = vmatmul.mubr.f32.gmra.mrb[0].mxu0 %v68
    %v142 = vpop.f32.mrb[0].mxu0
    %v143 = vadd.f32 %v54, %v142
    %v144 = vpop.f32.mrb[0].mxu0
    %v145 = vadd.f32 %v54, %v144
    %146 = vmatprep.mubr.f32.mxu0 0.0
    %147 = vmatmul.mubr.f32.gmra.mrb[0].mxu0 %v71
    %v148 = vpop.f32.mrb[0].mxu0
    %v149 = vadd.f32 %v59, %v148
    %v150 = vpop.f32.mrb[0].mxu0
    %v151 = vadd.f32 %v59, %v150
    %152 = vmatprep.mubr.f32.mxu0 0.0
    %153 = vmatmul.mubr.f32.gmra.mrb[0].mxu0 %v74
    %v154 = vpop.f32.mrb[0].mxu0
    %v155 = vadd.f32 %v64, %v154
    %v156 = vpop.f32.mrb[0].mxu0
    %v157 = vadd.f32 %v64, %v156
    %158 = vdwg.mxu0
    %159 = vmatprep.subr.mxu0 %v38
    %160 = vmatpush1.msra.mxu0 %v37
    %161 = vmatprep.subr.mxu0 %v42
    %162 = vmatpush1.msra.mxu0 %v41
    %163 = vmatprep.subr.mxu0 %v46
    %164 = vmatpush1.msra.mxu0 %v45
    %165 = vmatprep.subr.mxu0 %v50
    %166 = vmatpush1.msra.mxu0 %v49
    %167 = vmatprep.subr.mxu0 0.0
    %168 = vmatpush1.msra.mxu0 0.0
    %169 = vmatprep.subr.mxu0 0.0
    %170 = vmatpush1.msra.mxu0 0.0
    %171 = vmatprep.subr.mxu0 0.0
    %172 = vmatpush1.msra.mxu0 0.0
    %173 = vmatprep.subr.mxu0 0.0
    %174 = vmatpush1.msra.mxu0 0.0
    %175 = vmatprep.subr.mxu0 0.0
    %176 = vmatpush1.msra.mxu0 0.0
    %177 = vmatprep.subr.mxu0 0.0
    %178 = vmatpush1.msra.mxu0 0.0
    %179 = vmatprep.subr.mxu0 0.0
    %180 = vmatpush1.msra.mxu0 0.0
    %181 = vmatprep.subr.mxu0 0.0
    %182 = vmatpush1.msra.mxu0 0.0
    %183 = vmatprep.subr.mxu0 0.0
    %184 = vmatpush1.msra.mxu0 0.0
    %185 = vmatprep.subr.mxu0 0.0
    %186 = vmatpush1.msra.mxu0 0.0
    %187 = vmatprep.subr.mxu0 0.0
    %188 = vmatpush1.msra.mxu0 0.0
    %189 = vmatprep.subr.mxu0 0.0
    %190 = vmatpush1.msra.mxu0 0.0
    %191 = vmatprep.subr.mxu0 0.0
    %192 = vmatpush1.msra.mxu0 0.0
    %193 = vmatprep.subr.mxu0 0.0
    %194 = vmatpush1.msra.mxu0 0.0
    %195 = vmatprep.subr.mxu0 0.0
    %196 = vmatpush1.msra.mxu0 0.0
    %197 = vmatprep.subr.mxu0 0.0
    %198 = vmatpush1.msra.mxu0 0.0
    %199 = vmatprep.subr.mxu0 0.0
    %200 = vmatpush1.msra.mxu0 0.0
    %201 = vmatprep.subr.mxu0 0.0
    %202 = vmatpush1.msra.mxu0 0.0
    %203 = vmatprep.subr.mxu0 0.0
    %204 = vmatpush1.msra.mxu0 0.0
    %205 = vmatprep.subr.mxu0 0.0
    %206 = vmatpush1.msra.mxu0 0.0
    %207 = vmatprep.subr.mxu0 0.0
    %208 = vmatpush1.msra.mxu0 0.0
    %209 = vmatprep.subr.mxu0 0.0
    %210 = vmatpush1.msra.mxu0 0.0
    %211 = vmatprep.subr.mxu0 0.0
    %212 = vmatpush1.msra.mxu0 0.0
    %213 = vmatprep.subr.mxu0 0.0
    %214 = vmatpush1.msra.mxu0 0.0
    %215 = vmatprep.subr.mxu0 0.0
    %216 = vmatpush1.msra.mxu0 0.0
    %217 = vmatprep.subr.mxu0 0.0
    %218 = vmatpush1.msra.mxu0 0.0
    %219 = vmatprep.subr.mxu0 0.0
    %220 = vmatpush1.msra.mxu0 0.0
    %221 = vmatprep.subr.mxu0 0.0
    %222 = vmatpush1.msra.mxu0 0.0
    %223 = vmatprep.mubr.f32.mxu0 0.0
    %224 = vmatmul.mubr.f32.gmra.mrb[0].mxu0 %v68
    %v225 = vpop.f32.mrb[0].mxu0
    %v226 = vadd.f32 %v54, %v225
    %v227 = vpop.f32.mrb[0].mxu0
    %v228 = vadd.f32 %v54, %v227
    %229 = vmatprep.mubr.f32.mxu0 0.0
    %230 = vmatmul.mubr.f32.gmra.mrb[0].mxu0 %v71
    %v231 = vpop.f32.mrb[0].mxu0
    %v232 = vadd.f32 %v59, %v231
    %v233 = vpop.f32.mrb[0].mxu0
    %v234 = vadd.f32 %v59, %v233
    %235 = vmatprep.mubr.f32.mxu0 0.0
    %236 = vmatmul.mubr.f32.gmra.mrb[0].mxu0 %v74
    %v237 = vpop.f32.mrb[0].mxu0
    %v238 = vadd.f32 %v64, %v237
    %v239 = vpop.f32.mrb[0].mxu0
    %v240 = vadd.f32 %v64, %v239
    %241 = vdwg.mxu0
    %242 = vst [vmem:[#allocation5] sm:$0xff] %v143
    %243 = vst [vmem:[#allocation5 + $0x8] sm:$0xff] %v145
    %244 = vst [vmem:[#allocation5 + $0x10] sm:$0xff] %v226
    %245 = vst [vmem:[#allocation5 + $0x18] sm:$0xff] %v228
    %246 = vst [vmem:[#allocation5 + $0x30] sm:$0xff] %v149
    %247 = vst [vmem:[#allocation5 + $0x38] sm:$0xff] %v151
    %248 = vst [vmem:[#allocation5 + $0x40] sm:$0xff] %v232
    %249 = vst [vmem:[#allocation5 + $0x48] sm:$0xff] %v234
    %250 = vst [vmem:[#allocation5 + $0x60] sm:$0xff] %v155
    %251 = vst [vmem:[#allocation5 + $0x68] sm:$0xff] %v157
    %252 = vst [vmem:[#allocation5 + $0x70] sm:$0xff] %v238
    %253 = vst [vmem:[#allocation5 + $0x78] sm:$0xff] %v240
    %s254 = scalar_lea.vmem %s1, 24
    %v255 = vld [vmem:[%s254] sm:$0xff]
    %v256 = vld [vmem:[%s254 + $0x8] sm:$0xff]
    %v257 = vld [vmem:[%s254 + $0x10] sm:$0xff]
    %s258 = scalar_lea.vmem %s2, 24
    %v259 = vld [vmem:[%s258] sm:$0xff]
    %v260 = vld [vmem:[%s258 + $0x8] sm:$0xff]
    %v261 = vld [vmem:[%s258 + $0x10] sm:$0xff]
    %v262 = vld [vmem:[#allocation2 + $0x20] sm:$0xff]
    %v263 = vld [vmem:[#allocation2 + $0x50] sm:$0xff]
    %v264 = vld [vmem:[#allocation2 + $0x80] sm:$0xff]
    %v265 = vld [vmem:[#allocation2 + $0xb0] sm:$0xff]
    %267 = vset.pattern.permute.xlu0 0
    %268 = vperm.xlu0 %267, %v259
    %v269 = vpop.permute.xlu0 %268
    %272 = vset.pattern.permute.xlu0 0
    %273 = vperm.xlu0 %272, %v260
    %v274 = vpop.permute.xlu0 %273
    %277 = vset.pattern.permute.xlu0 0
    %278 = vperm.xlu0 %277, %v261
    %v279 = vpop.permute.xlu0 %278
    %v282 = vsel %vm66, %v255, 0
    %v285 = vsel %vm66, %v256, 0
    %v288 = vsel %vm66, %v257, 0
    %290 = vmatprep.subr.mxu0 0.0
    %291 = vmatpush1.msra.mxu0 %v262
    %292 = vmatprep.subr.mxu0 0.0
    %293 = vmatpush1.msra.mxu0 %v263
    %294 = vmatprep.subr.mxu0 0.0
    %295 = vmatpush1.msra.mxu0 %v264
    %296 = vmatprep.subr.mxu0 0.0
    %297 = vmatpush1.msra.mxu0 %v265
    %298 = vmatprep.subr.mxu0 0.0
    %299 = vmatpush1.msra.mxu0 0.0
    %300 = vmatprep.subr.mxu0 0.0
    %301 = vmatpush1.msra.mxu0 0.0
    %302 = vmatprep.subr.mxu0 0.0
    %303 = vmatpush1.msra.mxu0 0.0
    %304 = vmatprep.subr.mxu0 0.0
    %305 = vmatpush1.msra.mxu0 0.0
    %306 = vmatprep.subr.mxu0 0.0
    %307 = vmatpush1.msra.mxu0 0.0
    %308 = vmatprep.subr.mxu0 0.0
    %309 = vmatpush1.msra.mxu0 0.0
    %310 = vmatprep.subr.mxu0 0.0
    %311 = vmatpush1.msra.mxu0 0.0
    %312 = vmatprep.subr.mxu0 0.0
    %313 = vmatpush1.msra.mxu0 0.0
    %314 = vmatprep.subr.mxu0 0.0
    %315 = vmatpush1.msra.mxu0 0.0
    %316 = vmatprep.subr.mxu0 0.0
    %317 = vmatpush1.msra.mxu0 0.0
    %318 = vmatprep.subr.mxu0 0.0
    %319 = vmatpush1.msra.mxu0 0.0
    %320 = vmatprep.subr.mxu0 0.0
    %321 = vmatpush1.msra.mxu0 0.0
    %322 = vmatprep.subr.mxu0 0.0
    %323 = vmatpush1.msra.mxu0 0.0
    %324 = vmatprep.subr.mxu0 0.0
    %325 = vmatpush1.msra.mxu0 0.0
    %326 = vmatprep.subr.mxu0 0.0
    %327 = vmatpush1.msra.mxu0 0.0
    %328 = vmatprep.subr.mxu0 0.0
    %329 = vmatpush1.msra.mxu0 0.0
    %330 = vmatprep.subr.mxu0 0.0
    %331 = vmatpush1.msra.mxu0 0.0
    %332 = vmatprep.subr.mxu0 0.0
    %333 = vmatpush1.msra.mxu0 0.0
    %334 = vmatprep.subr.mxu0 0.0
    %335 = vmatpush1.msra.mxu0 0.0
    %336 = vmatprep.subr.mxu0 0.0
    %337 = vmatpush1.msra.mxu0 0.0
    %338 = vmatprep.subr.mxu0 0.0
    %339 = vmatpush1.msra.mxu0 0.0
    %340 = vmatprep.subr.mxu0 0.0
    %341 = vmatpush1.msra.mxu0 0.0
    %342 = vmatprep.subr.mxu0 0.0
    %343 = vmatpush1.msra.mxu0 0.0
    %344 = vmatprep.subr.mxu0 0.0
    %345 = vmatpush1.msra.mxu0 0.0
    %346 = vmatprep.subr.mxu0 0.0
    %347 = vmatpush1.msra.mxu0 0.0
    %348 = vmatprep.subr.mxu0 0.0
    %349 = vmatpush1.msra.mxu0 0.0
    %350 = vmatprep.subr.mxu0 0.0
    %351 = vmatpush1.msra.mxu0 0.0
    %352 = vmatprep.subr.mxu0 0.0
    %353 = vmatpush1.msra.mxu0 0.0
    %354 = vmatprep.mubr.f32.mxu0 0.0
    %355 = vmatmul.mubr.f32.gmra.mrb[0].mxu0 %v282
    %v356 = vpop.f32.mrb[0].mxu0
    %v357 = vadd.f32 %v269, %v356
    %v358 = vpop.f32.mrb[0].mxu0
    %359 = vmatprep.mubr.f32.mxu0 0.0
    %360 = vmatmul.mubr.f32.gmra.mrb[0].mxu0 %v285
    %v361 = vpop.f32.mrb[0].mxu0
    %v362 = vadd.f32 %v274, %v361
    %v363 = vpop.f32.mrb[0].mxu0
    %364 = vmatprep.mubr.f32.mxu0 0.0
    %365 = vmatmul.mubr.f32.gmra.mrb[0].mxu0 %v288
    %v366 = vpop.f32.mrb[0].mxu0
    %v367 = vadd.f32 %v279, %v366
    %v368 = vpop.f32.mrb[0].mxu0
    %369 = vdwg.mxu0
    %370 = vst [vmem:[#allocation5 + $0x20] sm:$0xff] %v357
    %371 = vst [vmem:[#allocation5 + $0x50] sm:$0xff] %v362
    %372 = vst [vmem:[#allocation5 + $0x80] sm:$0xff] %v367
    %s373 = scalar_lea.vmem %s1, 48
    %v374 = vld [vmem:[%s373] sm:$0xff]
    %v375 = vld [vmem:[%s373 + $0x8] sm:$0xff]
    %v376 = vld [vmem:[%s373 + $0x10] sm:$0xff]
    %s377 = scalar_lea.vmem %s2, 48
    %v378 = vld [vmem:[%s377] sm:$0xff]
    %v379 = vld [vmem:[%s377 + $0x8] sm:$0xff]
    %v380 = vld [vmem:[%s377 + $0x10] sm:$0xff]
    %v381 = vld [vmem:[#allocation2 + $0x28] sm:$0xff]
    %v382 = vld [vmem:[#allocation2 + $0x58] sm:$0xff]
    %v383 = vld [vmem:[#allocation2 + $0x88] sm:$0xff]
    %v384 = vld [vmem:[#allocation2 + $0xb8] sm:$0xff]
    %386 = vset.pattern.permute.xlu0 0
    %387 = vperm.xlu0 %386, %v378
    %v388 = vpop.permute.xlu0 %387
    %391 = vset.pattern.permute.xlu0 0
    %392 = vperm.xlu0 %391, %v379
    %v393 = vpop.permute.xlu0 %392
    %396 = vset.pattern.permute.xlu0 0
    %397 = vperm.xlu0 %396, %v380
    %v398 = vpop.permute.xlu0 %397
    %v401 = vsel %vm66, %v374, 0
    %v404 = vsel %vm66, %v375, 0
    %v407 = vsel %vm66, %v376, 0
    %409 = vmatprep.subr.mxu0 0.0
    %410 = vmatpush1.msra.mxu0 %v381
    %411 = vmatprep.subr.mxu0 0.0
    %412 = vmatpush1.msra.mxu0 %v382
    %413 = vmatprep.subr.mxu0 0.0
    %414 = vmatpush1.msra.mxu0 %v383
    %415 = vmatprep.subr.mxu0 0.0
    %416 = vmatpush1.msra.mxu0 %v384
    %417 = vmatprep.subr.mxu0 0.0
    %418 = vmatpush1.msra.mxu0 0.0
    %419 = vmatprep.subr.mxu0 0.0
    %420 = vmatpush1.msra.mxu0 0.0
    %421 = vmatprep.subr.mxu0 0.0
    %422 = vmatpush1.msra.mxu0 0.0
    %423 = vmatprep.subr.mxu0 0.0
    %424 = vmatpush1.msra.mxu0 0.0
    %425 = vmatprep.subr.mxu0 0.0
    %426 = vmatpush1.msra.mxu0 0.0
    %427 = vmatprep.subr.mxu0 0.0
    %428 = vmatpush1.msra.mxu0 0.0
    %429 = vmatprep.subr.mxu0 0.0
    %430 = vmatpush1.msra.mxu0 0.0
    %431 = vmatprep.subr.mxu0 0.0
    %432 = vmatpush1.msra.mxu0 0.0
    %433 = vmatprep.subr.mxu0 0.0
    %434 = vmatpush1.msra.mxu0 0.0
    %435 = vmatprep.subr.mxu0 0.0
    %436 = vmatpush1.msra.mxu0 0.0
    %437 = vmatprep.subr.mxu0 0.0
    %438 = vmatpush1.msra.mxu0 0.0
    %439 = vmatprep.subr.mxu0 0.0
    %440 = vmatpush1.msra.mxu0 0.0
    %441 = vmatprep.subr.mxu0 0.0
    %442 = vmatpush1.msra.mxu0 0.0
    %443 = vmatprep.subr.mxu0 0.0
    %444 = vmatpush1.msra.mxu0 0.0
    %445 = vmatprep.subr.mxu0 0.0
    %446 = vmatpush1.msra.mxu0 0.0
    %447 = vmatprep.subr.mxu0 0.0
    %448 = vmatpush1.msra.mxu0 0.0
    %449 = vmatprep.subr.mxu0 0.0
    %450 = vmatpush1.msra.mxu0 0.0
    %451 = vmatprep.subr.mxu0 0.0
    %452 = vmatpush1.msra.mxu0 0.0
    %453 = vmatprep.subr.mxu0 0.0
    %454 = vmatpush1.msra.mxu0 0.0
    %455 = vmatprep.subr.mxu0 0.0
    %456 = vmatpush1.msra.mxu0 0.0
    %457 = vmatprep.subr.mxu0 0.0
    %458 = vmatpush1.msra.mxu0 0.0
    %459 = vmatprep.subr.mxu0 0.0
    %460 = vmatpush1.msra.mxu0 0.0
    %461 = vmatprep.subr.mxu0 0.0
    %462 = vmatpush1.msra.mxu0 0.0
    %463 = vmatprep.subr.mxu0 0.0
    %464 = vmatpush1.msra.mxu0 0.0
    %465 = vmatprep.subr.mxu0 0.0
    %466 = vmatpush1.msra.mxu0 0.0
    %467 = vmatprep.subr.mxu0 0.0
    %468 = vmatpush1.msra.mxu0 0.0
    %469 = vmatprep.subr.mxu0 0.0
    %470 = vmatpush1.msra.mxu0 0.0
    %471 = vmatprep.subr.mxu0 0.0
    %472 = vmatpush1.msra.mxu0 0.0
    %473 = vmatprep.mubr.f32.mxu0 0.0
    %474 = vmatmul.mubr.f32.gmra.mrb[0].mxu0 %v401
    %v475 = vpop.f32.mrb[0].mxu0
    %v476 = vadd.f32 %v388, %v475
    %v477 = vpop.f32.mrb[0].mxu0
    %478 = vmatprep.mubr.f32.mxu0 0.0
    %479 = vmatmul.mubr.f32.gmra.mrb[0].mxu0 %v404
    %v480 = vpop.f32.mrb[0].mxu0
    %v481 = vadd.f32 %v393, %v480
    %v482 = vpop.f32.mrb[0].mxu0
    %483 = vmatprep.mubr.f32.mxu0 0.0
    %484 = vmatmul.mubr.f32.gmra.mrb[0].mxu0 %v407
    %v485 = vpop.f32.mrb[0].mxu0
    %v486 = vadd.f32 %v398, %v485
    %v487 = vpop.f32.mrb[0].mxu0
    %488 = vdwg.mxu0
    %489 = vst [vmem:[#allocation5 + $0x28] sm:$0xff] %v476
    %490 = vst [vmem:[#allocation5 + $0x58] sm:$0xff] %v481
    %491 = vst [vmem:[#allocation5 + $0x88] sm:$0xff] %v486
    // Predicated region
    $region18: #{tpu_custom_call.1} parent=1 // pred_check
      _
    $region19: #{tpu_custom_call.1} parent=1 // pred_check_branch
      %493 = sbr.rel (0) target = $region21
    $region20: #{tpu_custom_call.1} parent=1 // pred_region
      %s495 = ssub.s32 2304, 2304
      %496 = vsyncadd [#allocation4], %s495
      %s497 = sshll.u32 [#allocation5], 4
      %s498 = int_to_ptr.vmem [resolvable:$true] %s497
      %503 = dma.vmem_to_hbm [thread:$0]  %s498, 2304, %s3, [#allocation4], 768, 768, 48
    $region21: #{tpu_custom_call.1} parent=1 // pred_fallthru
      _
    // Predicated region
    $region22: #{tpu_custom_call.1} parent=1 // pred_check
      _
    $region23: #{tpu_custom_call.1} parent=1 // pred_check_branch
      %505 = sbr.rel (0) target = $region25
    $region24: #{tpu_custom_call.1} parent=1 // pred_region
      %506 = dma.done [#allocation4], 2304
    $region25: #{tpu_custom_call.1} parent=1 // pred_fallthru
      _
    %507 = vsyncpa [#allocation3], 1
    %508 = vsyncpa [#allocation4], 1

</llo_original>
